<compile_context>
chip_gen: v7x
topology: tpu7x:2x2x1
jax: 0.10.0
libtpu: 0.0.40
codegen_flags: <defaults>
</compile_context>

<pallas_src>
import functools

import jax
import jax.numpy as jnp
from jax import lax
from jax.experimental import pallas as pl
from jax.experimental.pallas import tpu as pltpu


def _lstm_kernel(x_ref, h0_ref, wh_ref, wx_ref, b_ref, out_ref,
                 xproj_ref, h_ref, c_ref, *, t_blk, b_blk, hidden, unroll):
    """One (batch block, time chunk) grid step of the LSTM recurrence.

    x_ref    : (T_blk, B_blk, D)  inputs for this chunk (float32)
    h0_ref   : (B_blk, H)         initial hidden state (float32)
    wh_ref   : (H, 4H)            stacked gate weights on h   (order f,i,o,c)
    wx_ref   : (D, 4H)            stacked gate weights on x_t (order f,i,o,c)
    b_ref    : (1, 4H)            stacked gate biases         (order f,i,o,c)
    out_ref  : (T_blk, B_blk, H)  output block (float32)
    xproj_ref: (T_blk, B_blk, 4H) f32 scratch for the hoisted input projection
    h_ref    : (B_blk, H)         persistent h carry (compute dtype)
    c_ref    : (B_blk, H)         persistent C carry (float32)

    The candidate-gate (c) columns of wh/wx/b were pre-scaled by 2 in the
    wrapper, so tanh(z) == 2*sigmoid(2z) - 1 lets a single sigmoid cover all
    four gates.
    """
    H = hidden
    t_chunk = pl.program_id(1)

    # Initialize the recurrent carry at the first time chunk of a batch block.
    @pl.when(t_chunk == 0)
    def _():
        h_ref[...] = h0_ref[...].astype(h_ref.dtype)
        c_ref[...] = jnp.zeros_like(c_ref)

    # Phase 0: per-chunk hoisted input projection (one well-filled matmul).
    # x stays f32 into the kernel so the leading-dim merge reshape is layout
    # trivial; the MXU operand cast happens once per chunk, not per step.
    x2d = x_ref[...].reshape(t_blk * b_blk, -1).astype(wx_ref.dtype)
    xproj_ref[...] = (
        jnp.dot(x2d, wx_ref[...], preferred_element_type=jnp.float32)
        + b_ref[...]).reshape(t_blk, b_blk, 4 * H)

    wh = wh_ref[...]
    h0 = h_ref[...]          # compute dtype (bf16 on the fast path)
    c0 = c_ref[...]          # float32

    # Phase 1: serial recurrence; only h @ Wh is on the critical path.
    def step(t, carry):
        h, c = carry
        xp = xproj_ref[t]                                    # (B_blk, 4H) f32
        gates = jnp.dot(h, wh, preferred_element_type=jnp.float32) + xp

        # One EUP launch for all four gates.
        s = jax.nn.sigmoid(gates)
        f_t = s[:, 0 * H:1 * H]
        i_t = s[:, 1 * H:2 * H]
        o_t = s[:, 2 * H:3 * H]
        c_tilde = 2.0 * s[:, 3 * H:] - 1.0                   # == tanh(z), VPU fixup

        c_new = f_t * c + i_t * c_tilde                      # f32 elementwise
        h_new = o_t * jnp.tanh(c_new)

        out_ref[t] = h_new.astype(out_ref.dtype)
        return h_new.astype(h.dtype), c_new

    h_fin, c_fin = lax.fori_loop(0, t_blk, step, (h0, c0), unroll=unroll)

    # Persist the carry for the next time chunk.
    h_ref[...] = h_fin
    c_ref[...] = c_fin


def lstm_forward(x, h0, w_h, w_x, b, *, compute_dtype=jnp.float32,
                 t_blk=None, b_blk=None):
    """x: (L,B,D), h0: (B,H), w_h: (H,4H), w_x: (D,4H), b: (4H,).

    Gate stacking order along the 4H axis must be (f, i, o, c).
    compute_dtype controls the MXU operand dtype and the h carry (use bf16 on
    v6e/v7x, keep float32 on v5e); C, accumulation and gate math stay float32.
    """
    L, B, D = x.shape
    _, H = h0.shape
    assert B % 8 == 0, "batch must be a multiple of 8 (f32 sublane alignment)"

    if t_blk is None:
        t_blk = min(L, 8)
    assert L % t_blk == 0, "sequence length must be a multiple of t_blk"
    if b_blk is None:
        b_blk = B
    assert B % b_blk == 0 and b_blk % 8 == 0

    # Pre-scale the candidate-gate columns by 2: tanh(z) = 2*sigmoid(2z) - 1,
    # so the kernel needs a single sigmoid slab per step.
    scale = jnp.concatenate(
        [jnp.ones((3 * H,), jnp.float32), jnp.full((H,), 2.0, jnp.float32)])
    w_h = (w_h.astype(jnp.float32) * scale).astype(compute_dtype)
    w_x = (w_x.astype(jnp.float32) * scale).astype(compute_dtype)
    b2 = (b.astype(jnp.float32) * scale).reshape(1, 4 * H)
    x = x.astype(jnp.float32)
    h0 = h0.astype(jnp.float32)

    n_b = B // b_blk
    n_t = L // t_blk
    unroll = t_blk if t_blk <= 8 else 8

    kernel = functools.partial(_lstm_kernel, t_blk=t_blk, b_blk=b_blk,
                               hidden=H, unroll=unroll)

    # Deterministic VMEM budget: double-buffered blocked operands + scratch,
    # plus headroom; clamped to the v7x 64 MiB physical ceiling.
    itemsize_c = jnp.dtype(compute_dtype).itemsize
    blk_bytes = (t_blk * b_blk * D * 4            # x block (f32)
                 + b_blk * H * 4                  # h0 block
                 + H * 4 * H * itemsize_c         # w_h
                 + D * 4 * H * itemsize_c         # w_x
                 + 4 * H * 4                      # bias
                 + t_blk * b_blk * H * 4)         # out block
    scratch_bytes = (t_blk * b_blk * 4 * H * 4    # xproj
                     + b_blk * H * itemsize_c     # h carry
                     + b_blk * H * 4)             # C carry
    vmem_limit = int(min(max(2 * blk_bytes + scratch_bytes + (1 << 20),
                             4 << 20), 64 << 20))

    return pl.pallas_call(
        kernel,
        out_shape=jax.ShapeDtypeStruct((L, B, H), jnp.float32),
        grid_spec=pltpu.PrefetchScalarGridSpec(
            num_scalar_prefetch=0,
            grid=(n_b, n_t),
            in_specs=[
                pl.BlockSpec((t_blk, b_blk, D), lambda bi, ti: (ti, bi, 0)),
                pl.BlockSpec((b_blk, H), lambda bi, ti: (bi, 0)),
                pl.BlockSpec((H, 4 * H), lambda bi, ti: (0, 0)),
                pl.BlockSpec((D, 4 * H), lambda bi, ti: (0, 0)),
                pl.BlockSpec((1, 4 * H), lambda bi, ti: (0, 0)),
            ],
            out_specs=pl.BlockSpec((t_blk, b_blk, H), lambda bi, ti: (ti, bi, 0)),
            scratch_shapes=[
                pltpu.VMEM((t_blk, b_blk, 4 * H), jnp.float32),  # xproj
                pltpu.VMEM((b_blk, H), compute_dtype),           # h carry
                pltpu.VMEM((b_blk, H), jnp.float32),             # C carry
            ]),
        compiler_params=pltpu.CompilerParams(
            dimension_semantics=("parallel", "arbitrary"),
            vmem_limit_bytes=vmem_limit),
    )(x, h0, w_h, w_x, b2)


def _reference_lstm(x, h0, wf, bf, wi, bi, wc, bc, wo, bo):
    """Pure-JAX reference mirroring the PyTorch module (intended recurrence)."""
    L = x.shape[0]
    h, c = h0, jnp.zeros_like(h0)
    outs = []
    for t in range(L):
        concat = jnp.concatenate([h, x[t]], axis=1)
        f_t = jax.nn.sigmoid(concat @ wf.T + bf)
        i_t = jax.nn.sigmoid(concat @ wi.T + bi)
        c_tilde = jnp.tanh(concat @ wc.T + bc)
        o_t = jax.nn.sigmoid(concat @ wo.T + bo)
        c = f_t * c + i_t * c_tilde
        h = o_t * jnp.tanh(c)
        outs.append(h)
    return jnp.stack(outs, axis=0)


if __name__ == "__main__":
    # Small shapes consistent with the module's forward():
    # input feature dim = 16, hidden_size = 32, length = 8, batch = 8.
    L, B, D, H = 8, 8, 16, 32

    key = jax.random.PRNGKey(0)
    kx, kh, kwf, kwi, kwc, kwo, kbf, kbi, kbc, kbo = jax.random.split(key, 10)

    x = jax.random.normal(kx, (L, B, D), dtype=jnp.float32)
    h0 = jax.random.normal(kh, (B, H), dtype=jnp.float32)

    # PyTorch nn.Linear(D+H, H) init: U(-1/sqrt(fan_in), 1/sqrt(fan_in));
    # weight shape (H, D+H) acting on concat([h, x]).
    bound = 1.0 / jnp.sqrt(jnp.float32(D + H))

    def make_linear(kw, kb):
        w = jax.random.uniform(kw, (H, D + H), jnp.float32, -bound, bound)
        bb = jax.random.uniform(kb, (H,), jnp.float32, -bound, bound)
        return w, bb

    wf, bf = make_linear(kwf, kbf)
    wi, bi = make_linear(kwi, kbi)
    wc, bc = make_linear(kwc, kbc)
    wo, bo = make_linear(kwo, kbo)

    # Stack the four gates in (f, i, o, c) order.  W.T is (H+D, 4H); the first
    # H rows multiply h (concat order is [h, x]), the last D rows multiply x.
    w_all = jnp.concatenate([wf.T, wi.T, wo.T, wc.T], axis=1)   # (H+D, 4H)
    w_h = w_all[:H, :]                                          # (H, 4H)
    w_x = w_all[H:, :]                                          # (D, 4H)
    b_all = jnp.concatenate([bf, bi, bo, bc], axis=0)           # (4H,)

    ref = _reference_lstm(x, h0, wf, bf, wi, bi, wc, bc, wo, bo)

    # f32 path, two time chunks (grid=(1, 2)) to exercise the carried state.
    out = lstm_forward(x, h0, w_h, w_x, b_all, t_blk=4)
    out = jax.block_until_ready(out)
    assert out.shape == (L, B, H)
    # tanh is evaluated as 2*sigmoid(2z)-1 in the kernel -> tiny extra error.
    assert jnp.allclose(out, ref, atol=1e-4, rtol=1e-4)

    # bf16-weight / bf16-h-carry fast path (v6e/v7x): C, accumulation and gate
    # math stay f32, so only a loose tolerance is expected.
    out_bf16 = lstm_forward(x, h0, w_h, w_x, b_all,
                            compute_dtype=jnp.bfloat16, t_blk=4)
    out_bf16 = jax.block_until_ready(out_bf16)
    assert jnp.max(jnp.abs(out_bf16 - ref)) < 1e-1

    print("KERNEL_OK")
</pallas_src>

<mosaic_0001>
module attributes {stable_mosaic.version = 11 : i64} {
  func.func @_lstm_kernel(%arg0: i32, %arg1: i32, %arg2: memref<4x8x16xf32, #tpu.memory_space<vmem>>, %arg3: memref<8x32xf32, #tpu.memory_space<vmem>>, %arg4: memref<32x128xf32, #tpu.memory_space<vmem>>, %arg5: memref<16x128xf32, #tpu.memory_space<vmem>>, %arg6: memref<1x128xf32, #tpu.memory_space<vmem>>, %arg7: memref<4x8x32xf32, #tpu.memory_space<vmem>>, %arg8: memref<4x8x128xf32, #tpu.memory_space<vmem>>, %arg9: memref<8x32xf32, #tpu.memory_space<vmem>>, %arg10: memref<8x32xf32, #tpu.memory_space<vmem>>) attributes {dimension_semantics = [#tpu.dimension_semantics<parallel>, #tpu.dimension_semantics<arbitrary>], iteration_bounds = array<i64: 1, 2>, scalar_prefetch = 0 : i64, scratch_operands = 3 : i64, tpu.core_type = #tpu.core_type<tc>, window_params = [{transform_indices = @transform_0, window_bounds = array<i64: 4, 8, 16>}, {transform_indices = @transform_1, window_bounds = array<i64: 8, 32>}, {pipeline_mode = #tpu.pipeline_mode<synchronous>, transform_indices = @transform_2, window_bounds = array<i64: 32, 128>}, {pipeline_mode = #tpu.pipeline_mode<synchronous>, transform_indices = @transform_3, window_bounds = array<i64: 16, 128>}, {pipeline_mode = #tpu.pipeline_mode<synchronous>, transform_indices = @transform_4, window_bounds = array<i64: 1, 128>}, {transform_indices = @transform_5, window_bounds = array<i64: 4, 8, 32>}]} {
    %c0_i32 = arith.constant 0 : i32
    %0 = arith.cmpi eq, %arg1, %c0_i32 : i32
    %1 = arith.extui %0 : i1 to i32
    %c0_i32_0 = arith.constant 0 : i32
    %2 = arith.cmpi ne, %1, %c0_i32_0 : i32
    scf.if %2 {
      %c0_53 = arith.constant 0 : index
      %c0_54 = arith.constant 0 : index
      %125 = vector.load %arg3[%c0_53, %c0_54] : memref<8x32xf32, #tpu.memory_space<vmem>>, vector<8x32xf32>
      %c0_55 = arith.constant 0 : index
      %c0_56 = arith.constant 0 : index
      %126 = vector.load %arg9[%c0_55, %c0_56] : memref<8x32xf32, #tpu.memory_space<vmem>>, vector<8x32xf32>
      tpu.vector_store %arg9[%c0_55, %c0_56], %125 {strides = array<i32>} : memref<8x32xf32, #tpu.memory_space<vmem>>, vector<8x32xf32>,
      %cst_57 = arith.constant 0.000000e+00 : f32
      %127 = vector.broadcast %cst_57 : f32 to vector<8x32xf32>
      %c0_58 = arith.constant 0 : index
      %c0_59 = arith.constant 0 : index
      %128 = vector.load %arg10[%c0_58, %c0_59] : memref<8x32xf32, #tpu.memory_space<vmem>>, vector<8x32xf32>
      tpu.vector_store %arg10[%c0_58, %c0_59], %127 {strides = array<i32>} : memref<8x32xf32, #tpu.memory_space<vmem>>, vector<8x32xf32>,
    } else {
    }
    %c0 = arith.constant 0 : index
    %c0_1 = arith.constant 0 : index
    %c0_2 = arith.constant 0 : index
    %3 = vector.load %arg2[%c0, %c0_1, %c0_2] : memref<4x8x16xf32, #tpu.memory_space<vmem>>, vector<4x8x16xf32>
    %4 = vector.shape_cast %3 : vector<4x8x16xf32> to vector<32x16xf32>
    %c0_3 = arith.constant 0 : index
    %c0_4 = arith.constant 0 : index
    %5 = vector.load %arg5[%c0_3, %c0_4] : memref<16x128xf32, #tpu.memory_space<vmem>>, vector<16x128xf32>
    %cst = arith.constant dense<0.000000e+00> : vector<32x128xf32>
    %6 = tpu.matmul %4, %5, %cst {dimension_numbers = #tpu.dot_dimension_numbers<[1], [0], [0], [1], [0, 0, 1, 1], [], []>} : vector<32x16xf32>, vector<16x128xf32>, vector<32x128xf32> -> vector<32x128xf32>
    %c0_5 = arith.constant 0 : index
    %c0_6 = arith.constant 0 : index
    %7 = vector.load %arg6[%c0_5, %c0_6] : memref<1x128xf32, #tpu.memory_space<vmem>>, vector<1x128xf32>
    %8 = vector.broadcast %7 : vector<1x128xf32> to vector<32x128xf32>
    %9 = arith.addf %6, %8 : vector<32x128xf32>
    %10 = vector.shape_cast %9 : vector<32x128xf32> to vector<4x8x128xf32>
    %c0_7 = arith.constant 0 : index
    %c0_8 = arith.constant 0 : index
    %c0_9 = arith.constant 0 : index
    %11 = vector.load %arg8[%c0_7, %c0_8, %c0_9] : memref<4x8x128xf32, #tpu.memory_space<vmem>>, vector<4x8x128xf32>
    tpu.vector_store %arg8[%c0_7, %c0_8, %c0_9], %10 {strides = array<i32>} : memref<4x8x128xf32, #tpu.memory_space<vmem>>, vector<4x8x128xf32>,
    %c0_10 = arith.constant 0 : index
    %c0_11 = arith.constant 0 : index
    %12 = vector.load %arg4[%c0_10, %c0_11] : memref<32x128xf32, #tpu.memory_space<vmem>>, vector<32x128xf32>
    %c0_12 = arith.constant 0 : index
    %c0_13 = arith.constant 0 : index
    %13 = vector.load %arg9[%c0_12, %c0_13] : memref<8x32xf32, #tpu.memory_space<vmem>>, vector<8x32xf32>
    %c0_14 = arith.constant 0 : index
    %c0_15 = arith.constant 0 : index
    %14 = vector.load %arg10[%c0_14, %c0_15] : memref<8x32xf32, #tpu.memory_space<vmem>>, vector<8x32xf32>
    %c0_i32_16 = arith.constant 0 : i32
    %15 = arith.index_cast %c0_i32_16 : i32 to index
    %c0_17 = arith.constant 0 : index
    %c0_18 = arith.constant 0 : index
    %16 = vector.load %arg8[%15, %c0_17, %c0_18] : memref<4x8x128xf32, #tpu.memory_space<vmem>>, vector<1x8x128xf32>
    %17 = vector.shape_cast %16 : vector<1x8x128xf32> to vector<8x128xf32>
    %cst_19 = arith.constant dense<0.000000e+00> : vector<8x128xf32>
    %18 = tpu.matmul %13, %12, %cst_19 {dimension_numbers = #tpu.dot_dimension_numbers<[1], [0], [0], [1], [0, 0, 1, 1], [], []>} : vector<8x32xf32>, vector<32x128xf32>, vector<8x128xf32> -> vector<8x128xf32>
    %19 = arith.addf %18, %17 : vector<8x128xf32>
    %20 = arith.negf %19 : vector<8x128xf32>
    %21 = math.exp %20 : vector<8x128xf32>
    %cst_20 = arith.constant 1.000000e+00 : f32
    %22 = vector.broadcast %cst_20 : f32 to vector<8x128xf32>
    %23 = arith.addf %22, %21 : vector<8x128xf32>
    %24 = arith.divf %22, %23 : vector<8x128xf32>
    %25 = vector.extract_strided_slice %24 {offsets = [0, 0], sizes = [8, 32], strides = [1, 1]} : vector<8x128xf32> to vector<8x32xf32>
    %26 = vector.extract_strided_slice %24 {offsets = [0, 32], sizes = [8, 32], strides = [1, 1]} : vector<8x128xf32> to vector<8x32xf32>
    %27 = vector.extract_strided_slice %24 {offsets = [0, 64], sizes = [8, 32], strides = [1, 1]} : vector<8x128xf32> to vector<8x32xf32>
    %28 = vector.extract_strided_slice %24 {offsets = [0, 96], sizes = [8, 32], strides = [1, 1]} : vector<8x128xf32> to vector<8x32xf32>
    %cst_21 = arith.constant 2.000000e+00 : f32
    %29 = vector.broadcast %cst_21 : f32 to vector<8x32xf32>
    %30 = arith.mulf %29, %28 : vector<8x32xf32>
    %cst_22 = arith.constant 1.000000e+00 : f32
    %31 = vector.broadcast %cst_22 : f32 to vector<8x32xf32>
    %32 = arith.subf %30, %31 : vector<8x32xf32>
    %33 = arith.mulf %25, %14 : vector<8x32xf32>
    %34 = arith.mulf %26, %32 : vector<8x32xf32>
    %35 = arith.addf %33, %34 : vector<8x32xf32>
    %36 = math.tanh %35 : vector<8x32xf32>
    %37 = arith.mulf %27, %36 : vector<8x32xf32>
    %38 = arith.index_cast %c0_i32_16 : i32 to index
    %c0_23 = arith.constant 0 : index
    %c0_24 = arith.constant 0 : index
    %39 = vector.load %arg7[%38, %c0_23, %c0_24] : memref<4x8x32xf32, #tpu.memory_space<vmem>>, vector<1x8x32xf32>
    %40 = vector.shape_cast %39 : vector<1x8x32xf32> to vector<8x32xf32>
    %41 = vector.shape_cast %37 : vector<8x32xf32> to vector<1x8x32xf32>
    tpu.vector_store %arg7[%38, %c0_23, %c0_24], %41 {strides = array<i32>} : memref<4x8x32xf32, #tpu.memory_space<vmem>>, vector<1x8x32xf32>,
    %c1_i32 = arith.constant 1 : i32
    %42 = arith.index_cast %c1_i32 : i32 to index
    %c0_25 = arith.constant 0 : index
    %c0_26 = arith.constant 0 : index
    %43 = vector.load %arg8[%42, %c0_25, %c0_26] : memref<4x8x128xf32, #tpu.memory_space<vmem>>, vector<1x8x128xf32>
    %44 = vector.shape_cast %43 : vector<1x8x128xf32> to vector<8x128xf32>
    %cst_27 = arith.constant dense<0.000000e+00> : vector<8x128xf32>
    %45 = tpu.matmul %37, %12, %cst_27 {dimension_numbers = #tpu.dot_dimension_numbers<[1], [0], [0], [1], [0, 0, 1, 1], [], []>} : vector<8x32xf32>, vector<32x128xf32>, vector<8x128xf32> -> vector<8x128xf32>
    %46 = arith.addf %45, %44 : vector<8x128xf32>
    %47 = arith.negf %46 : vector<8x128xf32>
    %48 = math.exp %47 : vector<8x128xf32>
    %cst_28 = arith.constant 1.000000e+00 : f32
    %49 = vector.broadcast %cst_28 : f32 to vector<8x128xf32>
    %50 = arith.addf %49, %48 : vector<8x128xf32>
    %51 = arith.divf %49, %50 : vector<8x128xf32>
    %52 = vector.extract_strided_slice %51 {offsets = [0, 0], sizes = [8, 32], strides = [1, 1]} : vector<8x128xf32> to vector<8x32xf32>
    %53 = vector.extract_strided_slice %51 {offsets = [0, 32], sizes = [8, 32], strides = [1, 1]} : vector<8x128xf32> to vector<8x32xf32>
    %54 = vector.extract_strided_slice %51 {offsets = [0, 64], sizes = [8, 32], strides = [1, 1]} : vector<8x128xf32> to vector<8x32xf32>
    %55 = vector.extract_strided_slice %51 {offsets = [0, 96], sizes = [8, 32], strides = [1, 1]} : vector<8x128xf32> to vector<8x32xf32>
    %cst_29 = arith.constant 2.000000e+00 : f32
    %56 = vector.broadcast %cst_29 : f32 to vector<8x32xf32>
    %57 = arith.mulf %56, %55 : vector<8x32xf32>
    %cst_30 = arith.constant 1.000000e+00 : f32
    %58 = vector.broadcast %cst_30 : f32 to vector<8x32xf32>
    %59 = arith.subf %57, %58 : vector<8x32xf32>
    %60 = arith.mulf %52, %35 : vector<8x32xf32>
    %61 = arith.mulf %53, %59 : vector<8x32xf32>
    %62 = arith.addf %60, %61 : vector<8x32xf32>
    %63 = math.tanh %62 : vector<8x32xf32>
    %64 = arith.mulf %54, %63 : vector<8x32xf32>
    %65 = arith.index_cast %c1_i32 : i32 to index
    %c0_31 = arith.constant 0 : index
    %c0_32 = arith.constant 0 : index
    %66 = vector.load %arg7[%65, %c0_31, %c0_32] : memref<4x8x32xf32, #tpu.memory_space<vmem>>, vector<1x8x32xf32>
    %67 = vector.shape_cast %66 : vector<1x8x32xf32> to vector<8x32xf32>
    %68 = vector.shape_cast %64 : vector<8x32xf32> to vector<1x8x32xf32>
    tpu.vector_store %arg7[%65, %c0_31, %c0_32], %68 {strides = array<i32>} : memref<4x8x32xf32, #tpu.memory_space<vmem>>, vector<1x8x32xf32>,
    %c2_i32 = arith.constant 2 : i32
    %69 = arith.index_cast %c2_i32 : i32 to index
    %c0_33 = arith.constant 0 : index
    %c0_34 = arith.constant 0 : index
    %70 = vector.load %arg8[%69, %c0_33, %c0_34] : memref<4x8x128xf32, #tpu.memory_space<vmem>>, vector<1x8x128xf32>
    %71 = vector.shape_cast %70 : vector<1x8x128xf32> to vector<8x128xf32>
    %cst_35 = arith.constant dense<0.000000e+00> : vector<8x128xf32>
    %72 = tpu.matmul %64, %12, %cst_35 {dimension_numbers = #tpu.dot_dimension_numbers<[1], [0], [0], [1], [0, 0, 1, 1], [], []>} : vector<8x32xf32>, vector<32x128xf32>, vector<8x128xf32> -> vector<8x128xf32>
    %73 = arith.addf %72, %71 : vector<8x128xf32>
    %74 = arith.negf %73 : vector<8x128xf32>
    %75 = math.exp %74 : vector<8x128xf32>
    %cst_36 = arith.constant 1.000000e+00 : f32
    %76 = vector.broadcast %cst_36 : f32 to vector<8x128xf32>
    %77 = arith.addf %76, %75 : vector<8x128xf32>
    %78 = arith.divf %76, %77 : vector<8x128xf32>
    %79 = vector.extract_strided_slice %78 {offsets = [0, 0], sizes = [8, 32], strides = [1, 1]} : vector<8x128xf32> to vector<8x32xf32>
    %80 = vector.extract_strided_slice %78 {offsets = [0, 32], sizes = [8, 32], strides = [1, 1]} : vector<8x128xf32> to vector<8x32xf32>
    %81 = vector.extract_strided_slice %78 {offsets = [0, 64], sizes = [8, 32], strides = [1, 1]} : vector<8x128xf32> to vector<8x32xf32>
    %82 = vector.extract_strided_slice %78 {offsets = [0, 96], sizes = [8, 32], strides = [1, 1]} : vector<8x128xf32> to vector<8x32xf32>
    %cst_37 = arith.constant 2.000000e+00 : f32
    %83 = vector.broadcast %cst_37 : f32 to vector<8x32xf32>
    %84 = arith.mulf %83, %82 : vector<8x32xf32>
    %cst_38 = arith.constant 1.000000e+00 : f32
    %85 = vector.broadcast %cst_38 : f32 to vector<8x32xf32>
    %86 = arith.subf %84, %85 : vector<8x32xf32>
    %87 = arith.mulf %79, %62 : vector<8x32xf32>
    %88 = arith.mulf %80, %86 : vector<8x32xf32>
    %89 = arith.addf %87, %88 : vector<8x32xf32>
    %90 = math.tanh %89 : vector<8x32xf32>
    %91 = arith.mulf %81, %90 : vector<8x32xf32>
    %92 = arith.index_cast %c2_i32 : i32 to index
    %c0_39 = arith.constant 0 : index
    %c0_40 = arith.constant 0 : index
    %93 = vector.load %arg7[%92, %c0_39, %c0_40] : memref<4x8x32xf32, #tpu.memory_space<vmem>>, vector<1x8x32xf32>
    %94 = vector.shape_cast %93 : vector<1x8x32xf32> to vector<8x32xf32>
    %95 = vector.shape_cast %91 : vector<8x32xf32> to vector<1x8x32xf32>
    tpu.vector_store %arg7[%92, %c0_39, %c0_40], %95 {strides = array<i32>} : memref<4x8x32xf32, #tpu.memory_space<vmem>>, vector<1x8x32xf32>,
    %c3_i32 = arith.constant 3 : i32
    %96 = arith.index_cast %c3_i32 : i32 to index
    %c0_41 = arith.constant 0 : index
    %c0_42 = arith.constant 0 : index
    %97 = vector.load %arg8[%96, %c0_41, %c0_42] : memref<4x8x128xf32, #tpu.memory_space<vmem>>, vector<1x8x128xf32>
    %98 = vector.shape_cast %97 : vector<1x8x128xf32> to vector<8x128xf32>
    %cst_43 = arith.constant dense<0.000000e+00> : vector<8x128xf32>
    %99 = tpu.matmul %91, %12, %cst_43 {dimension_numbers = #tpu.dot_dimension_numbers<[1], [0], [0], [1], [0, 0, 1, 1], [], []>} : vector<8x32xf32>, vector<32x128xf32>, vector<8x128xf32> -> vector<8x128xf32>
    %100 = arith.addf %99, %98 : vector<8x128xf32>
    %101 = arith.negf %100 : vector<8x128xf32>
    %102 = math.exp %101 : vector<8x128xf32>
    %cst_44 = arith.constant 1.000000e+00 : f32
    %103 = vector.broadcast %cst_44 : f32 to vector<8x128xf32>
    %104 = arith.addf %103, %102 : vector<8x128xf32>
    %105 = arith.divf %103, %104 : vector<8x128xf32>
    %106 = vector.extract_strided_slice %105 {offsets = [0, 0], sizes = [8, 32], strides = [1, 1]} : vector<8x128xf32> to vector<8x32xf32>
    %107 = vector.extract_strided_slice %105 {offsets = [0, 32], sizes = [8, 32], strides = [1, 1]} : vector<8x128xf32> to vector<8x32xf32>
    %108 = vector.extract_strided_slice %105 {offsets = [0, 64], sizes = [8, 32], strides = [1, 1]} : vector<8x128xf32> to vector<8x32xf32>
    %109 = vector.extract_strided_slice %105 {offsets = [0, 96], sizes = [8, 32], strides = [1, 1]} : vector<8x128xf32> to vector<8x32xf32>
    %cst_45 = arith.constant 2.000000e+00 : f32
    %110 = vector.broadcast %cst_45 : f32 to vector<8x32xf32>
    %111 = arith.mulf %110, %109 : vector<8x32xf32>
    %cst_46 = arith.constant 1.000000e+00 : f32
    %112 = vector.broadcast %cst_46 : f32 to vector<8x32xf32>
    %113 = arith.subf %111, %112 : vector<8x32xf32>
    %114 = arith.mulf %106, %89 : vector<8x32xf32>
    %115 = arith.mulf %107, %113 : vector<8x32xf32>
    %116 = arith.addf %114, %115 : vector<8x32xf32>
    %117 = math.tanh %116 : vector<8x32xf32>
    %118 = arith.mulf %108, %117 : vector<8x32xf32>
    %119 = arith.index_cast %c3_i32 : i32 to index
    %c0_47 = arith.constant 0 : index
    %c0_48 = arith.constant 0 : index
    %120 = vector.load %arg7[%119, %c0_47, %c0_48] : memref<4x8x32xf32, #tpu.memory_space<vmem>>, vector<1x8x32xf32>
    %121 = vector.shape_cast %120 : vector<1x8x32xf32> to vector<8x32xf32>
    %122 = vector.shape_cast %118 : vector<8x32xf32> to vector<1x8x32xf32>
    tpu.vector_store %arg7[%119, %c0_47, %c0_48], %122 {strides = array<i32>} : memref<4x8x32xf32, #tpu.memory_space<vmem>>, vector<1x8x32xf32>,
    %c4_i32 = arith.constant 4 : i32
    %c0_49 = arith.constant 0 : index
    %c0_50 = arith.constant 0 : index
    %123 = vector.load %arg9[%c0_49, %c0_50] : memref<8x32xf32, #tpu.memory_space<vmem>>, vector<8x32xf32>
    tpu.vector_store %arg9[%c0_49, %c0_50], %118 {strides = array<i32>} : memref<8x32xf32, #tpu.memory_space<vmem>>, vector<8x32xf32>,
    %c0_51 = arith.constant 0 : index
    %c0_52 = arith.constant 0 : index
    %124 = vector.load %arg10[%c0_51, %c0_52] : memref<8x32xf32, #tpu.memory_space<vmem>>, vector<8x32xf32>
    tpu.vector_store %arg10[%c0_51, %c0_52], %116 {strides = array<i32>} : memref<8x32xf32, #tpu.memory_space<vmem>>, vector<8x32xf32>,
    return
  }
  func.func @transform_0(%arg0: i32, %arg1: i32) -> (i32, i32, i32) {
    %c0_i32 = arith.constant 0 : i32
    %c0_i32_0 = arith.constant 0 : i32
    return %arg1, %arg0, %c0_i32 : i32, i32, i32
  }
  func.func @transform_1(%arg0: i32, %arg1: i32) -> (i32, i32) {
    %c0_i32 = arith.constant 0 : i32
    %c0_i32_0 = arith.constant 0 : i32
    return %arg0, %c0_i32 : i32, i32
  }
  func.func @transform_2(%arg0: i32, %arg1: i32) -> (i32, i32) {
    %c0_i32 = arith.constant 0 : i32
    %c0_i32_0 = arith.constant 0 : i32
    %c0_i32_1 = arith.constant 0 : i32
    return %c0_i32, %c0_i32_0 : i32, i32
  }
  func.func @transform_3(%arg0: i32, %arg1: i32) -> (i32, i32) {
    %c0_i32 = arith.constant 0 : i32
    %c0_i32_0 = arith.constant 0 : i32
    %c0_i32_1 = arith.constant 0 : i32
    return %c0_i32, %c0_i32_0 : i32, i32
  }
  func.func @transform_4(%arg0: i32, %arg1: i32) -> (i32, i32) {
    %c0_i32 = arith.constant 0 : i32
    %c0_i32_0 = arith.constant 0 : i32
    %c0_i32_1 = arith.constant 0 : i32
    return %c0_i32, %c0_i32_0 : i32, i32
  }
  func.func @transform_5(%arg0: i32, %arg1: i32) -> (i32, i32, i32) {
    %c0_i32 = arith.constant 0 : i32
    %c0_i32_0 = arith.constant 0 : i32
    return %arg1, %arg0, %c0_i32 : i32, i32, i32
  }
}

</mosaic_0001>

<llo_original>
// kernel: tpu_custom_call.1
$region0: #{tpu_custom_call.1}
  #allocation0 [shape = 'u32[]', space=smem, size = 0x4, offset = 0x4, fixed_abs, tag = 'smem constant byte address 0x4 - core index']
  #allocation1 [shape = 'u32[144,128]{1,0:T(1,128)}', space=vmem, size = 0x12000, scoped, tag = 'internal scratch']
  #allocation2 [shape = 'f32[4,8,128]{2,1,0:T(8,128)}', space=vmem, size = 0x4000, scoped, tag = 'scratch operand']
  #allocation3 [shape = 'f32[8,32]{1,0:T(8,128)}', space=vmem, size = 0x1000, scoped, tag = 'scratch operand']
  #allocation4 [shape = 'f32[8,32]{1,0:T(8,128)}', space=vmem, size = 0x1000, scoped, tag = 'scratch operand']
  %s0 = inlined_call_operand.hbm [shape: f32[8,8,16], index: 0, kind: input, shape index: {}]
  %s1 = inlined_call_operand.hbm [shape: f32[8,32], index: 1, kind: input, shape index: {}]
  %s2 = inlined_call_operand.hbm [shape: f32[32,128], index: 2, kind: input, shape index: {}]
  %s3 = inlined_call_operand.hbm [shape: f32[16,128], index: 3, kind: input, shape index: {}]
  %s4 = inlined_call_operand.vmem [shape: f32[1,128], index: 4, kind: input, shape index: {}]
  %s5 = inlined_call_operand.hbm [shape: f32[8,8,32], index: 5, kind: output, shape index: {}]
  %s6 = sld [smem:[#allocation0]]
  $region73: #{tpu_custom_call.1} parent=0
    _
  %s8 = ssub.s32 1, %s6
  %s9 = scalar_select 0, %s8, %s6
  $region1: #{tpu_custom_call.1} parent=0
    #allocation5 [shape = 'u8[32768]{0}', space=vmem, size = 0x8000, scoped, tag = 'input window, operand 0']
    #allocation6 [shape = 's32[2]{0}', space=sflag, size = 0x8, scoped, tag = 'scoped memory for tpu_custom_call.1']
    #allocation7 [shape = 's32[2]{0}', space=sflag, size = 0x8, scoped, tag = 'scoped memory for tpu_custom_call.1']
    #allocation8 [shape = 'u8[4096]{0}', space=vmem, size = 0x1000, scoped, tag = 'input window, operand 1, single buffered']
    #allocation9 [shape = 's32[1]{0}', space=sflag, size = 0x4, scoped, tag = 'scoped memory for tpu_custom_call.1']
    #allocation10 [shape = 'u8[16384]{0}', space=vmem, size = 0x4000, scoped, tag = 'input window, operand 2, single buffered']
    #allocation11 [shape = 'u8[8192]{0}', space=vmem, size = 0x2000, scoped, tag = 'input window, operand 3, single buffered']
    #allocation12 [shape = 's32[1]{0}', space=sflag, size = 0x4, scoped, tag = 'scoped memory for tpu_custom_call.1']
    #allocation13 [shape = 'u8[32768]{0}', space=vmem, size = 0x8000, scoped, tag = 'output window, operand 0']
    %10 = vsyncpa [#allocation6], 0
    %s11 = scalar_lea.sflag [#allocation6], 1
    %12 = vsyncpa %s11, 0
    %13 = vsyncpa [#allocation9], 0
    %14 = vsyncpa [#allocation12], 0
    %15 = vsyncpa [#allocation7], 0
    %s16 = scalar_lea.sflag [#allocation7], 1
    %17 = vsyncpa %s16, 0
    loop: start=0, step=1, limit=4
    $region2: #{tpu_custom_call.1} parent=1 // loop_pre_header
      _
    $region3: #{tpu_custom_call.1} parent=1 // loop_header
      %s19 = sphi 0, %s23
      %p20 = scmp.ge.s32.totalorder %s19, 4
      %s26 = sphi 0, %s38
      %s27 = sphi 0, %s34
      %s28 = sphi 0, %s26
      %s29 = sphi 0, %s27
      %s30 = sphi 0, %s28
      %s31 = sphi 0, %s29
      %s43 = sphi 0, %s45
      %s46 = sphi 0, %s43
      %s47 = sphi 0, %s46
      %s63 = sphi 0, %s47
      %s69 = sphi 0, %s71
      %s72 = sphi 0, %s69
      %s73 = sphi 0, %s72
      %s89 = sphi 0, %s73
      %s93 = sphi 0, %s93
      %s95 = sphi 0, %s93
      %s96 = sphi 0, %s95
      %s110 = sphi 0, %s96
      %s114 = sphi 0, %s114
      %s116 = sphi 0, %s114
      %s117 = sphi 0, %s116
      %s131 = sphi 0, %s117
      %s135 = sphi 0, %s135
      %s137 = sphi 0, %s135
      %s138 = sphi 0, %s137
      %s152 = sphi 0, %s138
      %s160 = sphi 0, %s162
      %s163 = sphi 0, %s160
      %s164 = sphi 0, %s163
      %s180 = sphi 0, %s164
    $region4: #{tpu_custom_call.1} parent=1 // loop_header_branch
      %22 = sbr.rel (%p20) target = $region8
    $region5: #{tpu_custom_call.1} parent=1 // loop_body
      %s24 = ssub.s32 %s19, 1
      %s25 = ssub.s32 %s19, 2
      %s32 = sadd.s32 1, %s27
      %p33 = scmp.ge.s32.totalorder %s32, 2
      %s34 = scalar_select %p33, 0, %s32
      %s35 = sadd.s32 1, %s26
      %s36 = scalar_select %p33, %s35, %s26
      %p37 = scmp.ge.s32.totalorder %s36, 1
      %s38 = scalar_select %p37, 0, %s36
      %s39 = ssub.s32 %s27, %s34
      %s40 = ssub.s32 %s26, %s38
      %s41 = sor.u32 %s39, %s40
      %p42 = scmp.eq.s32.totalorder %s41, 0
      %s44 = sadd.s32 %s43, 1
      %s45 = scalar_select %p42, %s43, %s44
      %p48 = pneg %p42
      %p49 = scmp.eq.s32.totalorder %s19, 1
      %p50 = por %p48, %p49
      %p51 = scmp.ne.s32.totalorder %s43, %s46
      %p52 = scmp.eq.s32.totalorder %s19, 0
      %p53 = por %p51, %p52
      %p54 = scmp.ne.s32.totalorder %s43, %s46
      %p55 = scmp.eq.s32.totalorder %s24, 1
      %p56 = por %p54, %p55
      %p57 = scmp.ne.s32.totalorder %s46, %s47
      %p58 = scmp.eq.s32.totalorder %s24, 0
      %p59 = por %p57, %p58
      %p60 = scmp.ne.s32.totalorder %s46, %s47
      %p61 = scmp.eq.s32.totalorder %s25, 1
      %p62 = por %p60, %p61
      %p64 = scmp.ne.s32.totalorder %s47, %s63
      %p65 = scmp.eq.s32.totalorder %s25, 0
      %p66 = por %p64, %p65
      %s67 = ssub.s32 %s26, %s38
      %p68 = scmp.eq.s32.totalorder %s67, 0
      %s70 = sadd.s32 %s69, 1
      %s71 = scalar_select %p68, %s69, %s70
      %p74 = pneg %p68
      %p75 = scmp.eq.s32.totalorder %s19, 1
      %p76 = por %p74, %p75
      %p77 = scmp.ne.s32.totalorder %s69, %s72
      %p78 = scmp.eq.s32.totalorder %s19, 0
      %p79 = por %p77, %p78
      %p80 = scmp.ne.s32.totalorder %s69, %s72
      %p81 = scmp.eq.s32.totalorder %s24, 1
      %p82 = por %p80, %p81
      %p83 = scmp.ne.s32.totalorder %s72, %s73
      %p84 = scmp.eq.s32.totalorder %s24, 0
      %p85 = por %p83, %p84
      %p86 = scmp.ne.s32.totalorder %s72, %s73
      %p87 = scmp.eq.s32.totalorder %s25, 1
      %p88 = por %p86, %p87
      %p90 = scmp.ne.s32.totalorder %s73, %s89
      %p91 = scmp.eq.s32.totalorder %s25, 0
      %p92 = por %p90, %p91
      %s94 = sadd.s32 %s93, 1
      %p97 = scmp.eq.s32.totalorder %s19, 1
      %p98 = scmp.ne.s32.totalorder %s93, %s95
      %p99 = scmp.eq.s32.totalorder %s19, 0
      %p100 = por %p98, %p99
      %p101 = scmp.ne.s32.totalorder %s93, %s95
      %p102 = scmp.eq.s32.totalorder %s24, 1
      %p103 = por %p101, %p102
      %p104 = scmp.ne.s32.totalorder %s95, %s96
      %p105 = scmp.eq.s32.totalorder %s24, 0
      %p106 = por %p104, %p105
      %p107 = scmp.ne.s32.totalorder %s95, %s96
      %p108 = scmp.eq.s32.totalorder %s25, 1
      %p109 = por %p107, %p108
      %p111 = scmp.ne.s32.totalorder %s96, %s110
      %p112 = scmp.eq.s32.totalorder %s25, 0
      %p113 = por %p111, %p112
      %s115 = sadd.s32 %s114, 1
      %p118 = scmp.eq.s32.totalorder %s19, 1
      %p119 = scmp.ne.s32.totalorder %s114, %s116
      %p120 = scmp.eq.s32.totalorder %s19, 0
      %p121 = por %p119, %p120
      %p122 = scmp.ne.s32.totalorder %s114, %s116
      %p123 = scmp.eq.s32.totalorder %s24, 1
      %p124 = por %p122, %p123
      %p125 = scmp.ne.s32.totalorder %s116, %s117
      %p126 = scmp.eq.s32.totalorder %s24, 0
      %p127 = por %p125, %p126
      %p128 = scmp.ne.s32.totalorder %s116, %s117
      %p129 = scmp.eq.s32.totalorder %s25, 1
      %p130 = por %p128, %p129
      %p132 = scmp.ne.s32.totalorder %s117, %s131
      %p133 = scmp.eq.s32.totalorder %s25, 0
      %p134 = por %p132, %p133
      %s136 = sadd.s32 %s135, 1
      %p139 = scmp.eq.s32.totalorder %s19, 1
      %p140 = scmp.ne.s32.totalorder %s135, %s137
      %p141 = scmp.eq.s32.totalorder %s19, 0
      %p142 = por %p140, %p141
      %p143 = scmp.ne.s32.totalorder %s135, %s137
      %p144 = scmp.eq.s32.totalorder %s24, 1
      %p145 = por %p143, %p144
      %p146 = scmp.ne.s32.totalorder %s137, %s138
      %p147 = scmp.eq.s32.totalorder %s24, 0
      %p148 = por %p146, %p147
      %p149 = scmp.ne.s32.totalorder %s137, %s138
      %p150 = scmp.eq.s32.totalorder %s25, 1
      %p151 = por %p149, %p150
      %p153 = scmp.ne.s32.totalorder %s138, %s152
      %p154 = scmp.eq.s32.totalorder %s25, 0
      %p155 = por %p153, %p154
      %s156 = ssub.s32 %s27, %s34
      %s157 = ssub.s32 %s26, %s38
      %s158 = sor.u32 %s156, %s157
      %p159 = scmp.eq.s32.totalorder %s158, 0
      %s161 = sadd.s32 %s160, 1
      %s162 = scalar_select %p159, %s160, %s161
      %p165 = pneg %p159
      %p166 = scmp.eq.s32.totalorder %s19, 1
      %p167 = por %p165, %p166
      %p168 = scmp.ne.s32.totalorder %s160, %s163
      %p169 = scmp.eq.s32.totalorder %s19, 0
      %p170 = por %p168, %p169
      %p171 = scmp.ne.s32.totalorder %s160, %s163
      %p172 = scmp.eq.s32.totalorder %s24, 1
      %p173 = por %p171, %p172
      %p174 = scmp.ne.s32.totalorder %s163, %s164
      %p175 = scmp.eq.s32.totalorder %s24, 0
      %p176 = por %p174, %p175
      %p177 = scmp.ne.s32.totalorder %s163, %s164
      %p178 = scmp.eq.s32.totalorder %s25, 1
      %p179 = por %p177, %p178
      %p181 = scmp.ne.s32.totalorder %s164, %s180
      %p182 = scmp.eq.s32.totalorder %s25, 0
      %p183 = por %p181, %p182
      %p184 = scmp.le.s32.totalorder 1, %s19
      %p185 = scmp.lt.s32.totalorder %s19, 3
      %p186 = pnand %p184, %p185
      %p187 = pneg %p186
      // Predicated region
      $region9: #{tpu_custom_call.1} parent=5 // pred_check
        _
      $region10: #{tpu_custom_call.1} parent=5 // pred_check_branch
        %189 = sbr.rel (%p186) target = $region12
      $region11: #{tpu_custom_call.1} parent=5 // pred_region
        %s190 = ssub.s32 %s19, 1
        // Predicated region
        $region13: #{tpu_custom_call.1} parent=11 // pred_check
          %p191 = pneg %p85
        $region14: #{tpu_custom_call.1} parent=11 // pred_check_branch
          %193 = sbr.rel (%p191) target = $region16
        $region15: #{tpu_custom_call.1} parent=11 // pred_region
          %s195 = ssub.s32 128, 128
          %196 = vsyncadd [#allocation9], %s195
          %s197 = smul.addr %s28, 128
          %s198 = scalar_lea.hbm %s1, %s197
          %s200 = sshll.u32 [#allocation8], 4
          %s201 = int_to_ptr.vmem [resolvable:$true] %s200
          %203 = dma.hbm_to_vmem [thread:$0]  %s198, 128, %s201, [#allocation9]
        $region16: #{tpu_custom_call.1} parent=11 // pred_fallthru
          _
        // Predicated region
        $region17: #{tpu_custom_call.1} parent=11 // pred_check
          %p204 = pneg %p106
        $region18: #{tpu_custom_call.1} parent=11 // pred_check_branch
          %206 = sbr.rel (%p204) target = $region20
        $region19: #{tpu_custom_call.1} parent=11 // pred_region
          %s208 = ssub.s32 512, 512
          %209 = vsyncadd [#allocation9], %s208
          %s210 = sshll.u32 [#allocation10], 4
          %s211 = int_to_ptr.vmem [resolvable:$true] %s210
          %216 = dma.hbm_to_vmem [thread:$0]  %s2, 512, %s211, [#allocation9], 128, 128, 8
        $region20: #{tpu_custom_call.1} parent=11 // pred_fallthru
          _
        // Predicated region
        $region21: #{tpu_custom_call.1} parent=11 // pred_check
          %p217 = pneg %p127
        $region22: #{tpu_custom_call.1} parent=11 // pred_check_branch
          %219 = sbr.rel (%p217) target = $region24
        $region23: #{tpu_custom_call.1} parent=11 // pred_region
          %s221 = ssub.s32 256, 256
          %222 = vsyncadd [#allocation12], %s221
          %s223 = sshll.u32 [#allocation11], 4
          %s224 = int_to_ptr.vmem [resolvable:$true] %s223
          %229 = dma.hbm_to_vmem [thread:$0]  %s3, 256, %s224, [#allocation12], 128, 128, 8
        $region24: #{tpu_custom_call.1} parent=11 // pred_fallthru
          _
        // Predicated region
        $region25: #{tpu_custom_call.1} parent=11 // pred_check
          %p230 = pneg %p148
        $region26: #{tpu_custom_call.1} parent=11 // pred_check_branch
          %232 = sbr.rel (%p230) target = $region28
        $region27: #{tpu_custom_call.1} parent=11 // pred_region
          _
        $region28: #{tpu_custom_call.1} parent=11 // pred_fallthru
          _
      $region12: #{tpu_custom_call.1} parent=5 // pred_fallthru
        _
      %p233 = scmp.lt.s32.totalorder %s19, 2
      // Predicated region
      $region29: #{tpu_custom_call.1} parent=5 // pred_check
        %p234 = pneg %p233
      $region30: #{tpu_custom_call.1} parent=5 // pred_check_branch
        %236 = sbr.rel (%p234) target = $region32
      $region31: #{tpu_custom_call.1} parent=5 // pred_region
        // Predicated region
        $region33: #{tpu_custom_call.1} parent=31 // pred_check
          %p237 = pneg %p53
        $region34: #{tpu_custom_call.1} parent=31 // pred_check_branch
          %239 = sbr.rel (%p237) target = $region36
        $region35: #{tpu_custom_call.1} parent=31 // pred_region
          %s240 = sand.u32 %s43, 1
          %s241 = scalar_lea.sflag [#allocation6], %s240
          %s242 = sand.u32 %s43, 1
          %s243 = smul.addr %s242, 32
          %s244 = scalar_lea.vmem [#allocation5], %s243
          %s245 = smul.u32 4, %s27
          %s247 = ssub.s32 512, 512
          %248 = vsyncadd %s241, %s247
          %s249 = sadd.s32 %s26, %s245
          %s250 = smul.addr %s249, 128
          %s251 = scalar_lea.hbm %s0, %s250
          %s252 = sshll.u32 %s244, 4
          %s253 = int_to_ptr.vmem [resolvable:$true] %s252
          %258 = dma.hbm_to_vmem [thread:$0]  %s251, 512, %s253, %s241, 128, 128, 8
        $region36: #{tpu_custom_call.1} parent=31 // pred_fallthru
          _
      $region32: #{tpu_custom_call.1} parent=5 // pred_fallthru
        _
      %p259 = scmp.le.s32.totalorder 1, %s19
      %p260 = scmp.lt.s32.totalorder %s19, 3
      %p261 = pnand %p259, %p260
      %p262 = pneg %p261
      // Predicated region
      $region37: #{tpu_custom_call.1} parent=5 // pred_check
        _
      $region38: #{tpu_custom_call.1} parent=5 // pred_check_branch
        %264 = sbr.rel (%p261) target = $region40
      $region39: #{tpu_custom_call.1} parent=5 // pred_region
        %s265 = ssub.s32 %s19, 1
        %s266 = sand.u32 %s46, 1
        %s267 = scalar_lea.sflag [#allocation6], %s266
        %s268 = sand.u32 %s46, 1
        %s269 = smul.addr %s268, 32
        %s270 = scalar_lea.vmem [#allocation5], %s269
        // Predicated region
        $region41: #{tpu_custom_call.1} parent=39 // pred_check
          %p271 = pneg %p59
        $region42: #{tpu_custom_call.1} parent=39 // pred_check_branch
          %273 = sbr.rel (%p271) target = $region44
        $region43: #{tpu_custom_call.1} parent=39 // pred_region
          %274 = dma.done %s267, 512
        $region44: #{tpu_custom_call.1} parent=39 // pred_fallthru
          _
        // Predicated region
        $region45: #{tpu_custom_call.1} parent=39 // pred_check
          %p275 = pneg %p85
        $region46: #{tpu_custom_call.1} parent=39 // pred_check_branch
          %277 = sbr.rel (%p275) target = $region48
        $region47: #{tpu_custom_call.1} parent=39 // pred_region
          %278 = dma.done [#allocation9], 128
        $region48: #{tpu_custom_call.1} parent=39 // pred_fallthru
          _
        // Predicated region
        $region49: #{tpu_custom_call.1} parent=39 // pred_check
          %p279 = pneg %p106
        $region50: #{tpu_custom_call.1} parent=39 // pred_check_branch
          %281 = sbr.rel (%p279) target = $region52
        $region51: #{tpu_custom_call.1} parent=39 // pred_region
          %282 = dma.done [#allocation9], 512
        $region52: #{tpu_custom_call.1} parent=39 // pred_fallthru
          _
        // Predicated region
        $region53: #{tpu_custom_call.1} parent=39 // pred_check
          %p283 = pneg %p127
        $region54: #{tpu_custom_call.1} parent=39 // pred_check_branch
          %285 = sbr.rel (%p283) target = $region56
        $region55: #{tpu_custom_call.1} parent=39 // pred_region
          %286 = dma.done [#allocation12], 256
        $region56: #{tpu_custom_call.1} parent=39 // pred_fallthru
          _
        %s287 = sand.u32 %s46, 1
        %s288 = scalar_lea.sflag [#allocation6], %s287
        %s289 = sand.u32 %s46, 1
        %s290 = smul.addr %s289, 32
        %s291 = scalar_lea.vmem [#allocation5], %s290
        %p292 = pneg %p59
        %p293 = pneg %p56
        %p294 = pneg %p85
        %p295 = pneg %p82
        %p296 = pneg %p106
        %p297 = pneg %p103
        %p298 = pneg %p127
        %p299 = pneg %p124
        %p300 = pneg %p148
        %p301 = pneg %p145
        %p302 = pneg %p176
        %p303 = pneg %p173
        %s304 = sand.u32 %s163, 1
        %s305 = scalar_lea.sflag [#allocation7], %s304
        %s306 = sand.u32 %s163, 1
        %s307 = smul.addr %s306, 32
        %s308 = scalar_lea.vmem [#allocation13], %s307
        %s309 = smul.u32 4, %s29
        %s310 = smul.u32 4, %s29
        %p311 = scmp.eq.s32.totalorder %s29, 0
        // Predicated region
        $region57: #{tpu_custom_call.1} parent=39 // pred_check
          %p312 = pneg %p311
        $region58: #{tpu_custom_call.1} parent=39 // pred_check_branch
          %314 = sbr.rel (%p312) target = $region60
        $region59: #{tpu_custom_call.1} parent=39 // pred_region
          %v315 = vld [vmem:[#allocation8] sm:$0xff]
          %vm316 = vcmask 261120
          %317 = vst.msk [vmem:[#allocation3] sm:$0xff] %vm316, %v315
          %318 = vst.msk [vmem:[#allocation4] sm:$0xff] %vm316, 0.0
        $region60: #{tpu_custom_call.1} parent=39 // pred_fallthru
          _
        %v319 = vld [vmem:[%s270] sm:$0xff]
        %v320 = vld [vmem:[%s270 + $0x8] sm:$0xff]
        %v321 = vld [vmem:[%s270 + $0x10] sm:$0xff]
        %v322 = vld [vmem:[%s270 + $0x18] sm:$0xff]
        %v323 = vld [vmem:[#allocation11] sm:$0xff]
        %v324 = vld [vmem:[#allocation11 + $0x8] sm:$0xff]
        %v325 = vld [vmem:[%s4] sm:$0x1]
        %v327 = vlaneseq
        %v328 = vshrl.u32 %v327, 7
        %v329 = vsub.s32 0, %v328
        %v330 = vrot.slane %v325, %v329
        %vm332 = vcmask 130048
        %v334 = vsel %vm332, %v319, 0
        %v337 = vsel %vm332, %v320, 0
        %v340 = vsel %vm332, %v321, 0
        %v343 = vsel %vm332, %v322, 0
        %345 = vmatprep.subr.mxu0 0.0
        %346 = vmatpush1.msra.mxu0 %v323
        %347 = vmatprep.subr.mxu0 0.0
        %348 = vmatpush1.msra.mxu0 %v324
        %349 = vmatprep.subr.mxu0 0.0
        %350 = vmatpush1.msra.mxu0 0.0
        %351 = vmatprep.subr.mxu0 0.0
        %352 = vmatpush1.msra.mxu0 0.0
        %353 = vmatprep.subr.mxu0 0.0
        %354 = vmatpush1.msra.mxu0 0.0
        %355 = vmatprep.subr.mxu0 0.0
        %356 = vmatpush1.msra.mxu0 0.0
        %357 = vmatprep.subr.mxu0 0.0
        %358 = vmatpush1.msra.mxu0 0.0
        %359 = vmatprep.subr.mxu0 0.0
        %360 = vmatpush1.msra.mxu0 0.0
        %361 = vmatprep.subr.mxu0 0.0
        %362 = vmatpush1.msra.mxu0 0.0
        %363 = vmatprep.subr.mxu0 0.0
        %364 = vmatpush1.msra.mxu0 0.0
        %365 = vmatprep.subr.mxu0 0.0
        %366 = vmatpush1.msra.mxu0 0.0
        %367 = vmatprep.subr.mxu0 0.0
        %368 = vmatpush1.msra.mxu0 0.0
        %369 = vmatprep.subr.mxu0 0.0
        %370 = vmatpush1.msra.mxu0 0.0
        %371 = vmatprep.subr.mxu0 0.0
        %372 = vmatpush1.msra.mxu0 0.0
        %373 = vmatprep.subr.mxu0 0.0
        %374 = vmatpush1.msra.mxu0 0.0
        %375 = vmatprep.subr.mxu0 0.0
        %376 = vmatpush1.msra.mxu0 0.0
        %377 = vmatprep.subr.mxu0 0.0
        %378 = vmatpush1.msra.mxu0 0.0
        %379 = vmatprep.subr.mxu0 0.0
        %380 = vmatpush1.msra.mxu0 0.0
        %381 = vmatprep.subr.mxu0 0.0
        %382 = vmatpush1.msra.mxu0 0.0
        %383 = vmatprep.subr.mxu0 0.0
        %384 = vmatpush1.msra.mxu0 0.0
        %385 = vmatprep.subr.mxu0 0.0
        %386 = vmatpush1.msra.mxu0 0.0
        %387 = vmatprep.subr.mxu0 0.0
        %388 = vmatpush1.msra.mxu0 0.0
        %389 = vmatprep.subr.mxu0 0.0
        %390 = vmatpush1.msra.mxu0 0.0
        %391 = vmatprep.subr.mxu0 0.0
        %392 = vmatpush1.msra.mxu0 0.0
        %393 = vmatprep.subr.mxu0 0.0
        %394 = vmatpush1.msra.mxu0 0.0
        %395 = vmatprep.subr.mxu0 0.0
        %396 = vmatpush1.msra.mxu0 0.0
        %397 = vmatprep.subr.mxu0 0.0
        %398 = vmatpush1.msra.mxu0 0.0
        %399 = vmatprep.subr.mxu0 0.0
        %400 = vmatpush1.msra.mxu0 0.0
        %401 = vmatprep.subr.mxu0 0.0
        %402 = vmatpush1.msra.mxu0 0.0
        %403 = vmatprep.subr.mxu0 0.0
        %404 = vmatpush1.msra.mxu0 0.0
        %405 = vmatprep.subr.mxu0 0.0
        %406 = vmatpush1.msra.mxu0 0.0
        %407 = vmatprep.subr.mxu0 0.0
        %408 = vmatpush1.msra.mxu0 0.0
        %409 = vmatprep.mubr.f32.mxu0 0.0
        %410 = vmatmul.mubr.f32.gmra.mrb[0].mxu0 %v334
        %v411 = vpop.f32.mrb[0].mxu0
        %v412 = vadd.f32 %v330, %v411
        %v413 = vpop.f32.mrb[0].mxu0
        %414 = vmatprep.mubr.f32.mxu0 0.0
        %415 = vmatmul.mubr.f32.gmra.mrb[0].mxu0 %v337
        %v416 = vpop.f32.mrb[0].mxu0
        %v417 = vadd.f32 %v330, %v416
        %v418 = vpop.f32.mrb[0].mxu0
        %419 = vmatprep.mubr.f32.mxu0 0.0
        %420 = vmatmul.mubr.f32.gmra.mrb[0].mxu0 %v340
        %v421 = vpop.f32.mrb[0].mxu0
        %v422 = vadd.f32 %v330, %v421
        %v423 = vpop.f32.mrb[0].mxu0
        %424 = vmatprep.mubr.f32.mxu0 0.0
        %425 = vmatmul.mubr.f32.gmra.mrb[0].mxu0 %v343
        %v426 = vpop.f32.mrb[0].mxu0
        %v427 = vadd.f32 %v330, %v426
        %v428 = vpop.f32.mrb[0].mxu0
        %429 = vdwg.mxu0
        %430 = vst [vmem:[#allocation2] sm:$0xff] %v412
        %431 = vst [vmem:[#allocation2 + $0x8] sm:$0xff] %v417
        %432 = vst [vmem:[#allocation2 + $0x10] sm:$0xff] %v422
        %433 = vst [vmem:[#allocation2 + $0x18] sm:$0xff] %v427
        %v434 = vld [vmem:[#allocation10] sm:$0xff]
        %v435 = vld [vmem:[#allocation10 + $0x8] sm:$0xff]
        %v436 = vld [vmem:[#allocation10 + $0x10] sm:$0xff]
        %v437 = vld [vmem:[#allocation10 + $0x18] sm:$0xff]
        %v438 = vld [vmem:[#allocation3] sm:$0xff]
        %v439 = vld [vmem:[#allocation4] sm:$0xff]
        %v440 = vld [vmem:[#allocation2] sm:$0xff]
        %vm441 = vcmask 261120
        %v443 = vsel %vm441, %v438, 0
        %445 = vmatprep.subr.mxu0 0.0
        %446 = vmatpush1.msra.mxu0 %v434
        %447 = vmatprep.subr.mxu0 0.0
        %448 = vmatpush1.msra.mxu0 %v435
        %449 = vmatprep.subr.mxu0 0.0
        %450 = vmatpush1.msra.mxu0 %v436
        %451 = vmatprep.subr.mxu0 0.0
        %452 = vmatpush1.msra.mxu0 %v437
        %453 = vmatprep.subr.mxu0 0.0
        %454 = vmatpush1.msra.mxu0 0.0
        %455 = vmatprep.subr.mxu0 0.0
        %456 = vmatpush1.msra.mxu0 0.0
        %457 = vmatprep.subr.mxu0 0.0
        %458 = vmatpush1.msra.mxu0 0.0
        %459 = vmatprep.subr.mxu0 0.0
        %460 = vmatpush1.msra.mxu0 0.0
        %461 = vmatprep.subr.mxu0 0.0
        %462 = vmatpush1.msra.mxu0 0.0
        %463 = vmatprep.subr.mxu0 0.0
        %464 = vmatpush1.msra.mxu0 0.0
        %465 = vmatprep.subr.mxu0 0.0
        %466 = vmatpush1.msra.mxu0 0.0
        %467 = vmatprep.subr.mxu0 0.0
        %468 = vmatpush1.msra.mxu0 0.0
        %469 = vmatprep.subr.mxu0 0.0
        %470 = vmatpush1.msra.mxu0 0.0
        %471 = vmatprep.subr.mxu0 0.0
        %472 = vmatpush1.msra.mxu0 0.0
        %473 = vmatprep.subr.mxu0 0.0
        %474 = vmatpush1.msra.mxu0 0.0
        %475 = vmatprep.subr.mxu0 0.0
        %476 = vmatpush1.msra.mxu0 0.0
        %477 = vmatprep.subr.mxu0 0.0
        %478 = vmatpush1.msra.mxu0 0.0
        %479 = vmatprep.subr.mxu0 0.0
        %480 = vmatpush1.msra.mxu0 0.0
        %481 = vmatprep.subr.mxu0 0.0
        %482 = vmatpush1.msra.mxu0 0.0
        %483 = vmatprep.subr.mxu0 0.0
        %484 = vmatpush1.msra.mxu0 0.0
        %485 = vmatprep.subr.mxu0 0.0
        %486 = vmatpush1.msra.mxu0 0.0
        %487 = vmatprep.subr.mxu0 0.0
        %488 = vmatpush1.msra.mxu0 0.0
        %489 = vmatprep.subr.mxu0 0.0
        %490 = vmatpush1.msra.mxu0 0.0
        %491 = vmatprep.subr.mxu0 0.0
        %492 = vmatpush1.msra.mxu0 0.0
        %493 = vmatprep.subr.mxu0 0.0
        %494 = vmatpush1.msra.mxu0 0.0
        %495 = vmatprep.subr.mxu0 0.0
        %496 = vmatpush1.msra.mxu0 0.0
        %497 = vmatprep.subr.mxu0 0.0
        %498 = vmatpush1.msra.mxu0 0.0
        %499 = vmatprep.subr.mxu0 0.0
        %500 = vmatpush1.msra.mxu0 0.0
        %501 = vmatprep.subr.mxu0 0.0
        %502 = vmatpush1.msra.mxu0 0.0
        %503 = vmatprep.subr.mxu0 0.0
        %504 = vmatpush1.msra.mxu0 0.0
        %505 = vmatprep.subr.mxu0 0.0
        %506 = vmatpush1.msra.mxu0 0.0
        %507 = vmatprep.subr.mxu0 0.0
        %508 = vmatpush1.msra.mxu0 0.0
        %509 = vmatprep.mubr.f32.mxu0 0.0
        %510 = vmatmul.mubr.f32.gmra.mrb[0].mxu0 %v443
        %v511 = vpop.f32.mrb[0].mxu0
        %v512 = vadd.f32 %v440, %v511
        %v513 = vpop.f32.mrb[0].mxu0
        %514 = vdwg.mxu0
        %v515 = vxor.u32 %v512, 2147483648
        %v516 = vmul.f32 %v515, 1.442695
        %v517 = vpow.pop %v516
        %v518 = vadd.f32 %v517, 1.0
        %v519 = vrcp.pop %v518
        %v520 = vmul.f32 1.0, %v519
        %v521 = vmul.f32 %v520, 2.0
        %v522 = vsub.f32 %v521, 1.0
        %v523 = vmul.f32 %v520, %v439
        %525 = vrot.lane.b32.xlu0 %v522, 64
        %v526 = vpop.permute.xlu0 %525
        %v528 = vmul.f32 %v520, %v526
        %530 = vrot.lane.b32.xlu0 %v528, 96
        %v531 = vpop.permute.xlu0 %530
        %v533 = vadd.f32 %v523, %v531
        %v534 = vtanh.pop %v533
        %536 = vrot.lane.b32.xlu0 %v534, 64
        %v537 = vpop.permute.xlu0 %536
        %v539 = vmul.f32 %v520, %v537
        %541 = vrot.lane.b32.xlu0 %v539, 64
        %v542 = vpop.permute.xlu0 %541
        %544 = vst.msk [vmem:[%s308] sm:$0xff] %vm441, %v542
        %s545 = scalar_lea.vmem [#allocation2], 8
        %v546 = vld [vmem:[%s545] sm:$0xff]
        %v547 = vsel %vm441, %v542, 0
        %549 = vmatprep.subr.mxu0 0.0
        %550 = vmatpush1.msra.mxu0 %v434
        %551 = vmatprep.subr.mxu0 0.0
        %552 = vmatpush1.msra.mxu0 %v435
        %553 = vmatprep.subr.mxu0 0.0
        %554 = vmatpush1.msra.mxu0 %v436
        %555 = vmatprep.subr.mxu0 0.0
        %556 = vmatpush1.msra.mxu0 %v437
        %557 = vmatprep.subr.mxu0 0.0
        %558 = vmatpush1.msra.mxu0 0.0
        %559 = vmatprep.subr.mxu0 0.0
        %560 = vmatpush1.msra.mxu0 0.0
        %561 = vmatprep.subr.mxu0 0.0
        %562 = vmatpush1.msra.mxu0 0.0
        %563 = vmatprep.subr.mxu0 0.0
        %564 = vmatpush1.msra.mxu0 0.0
        %565 = vmatprep.subr.mxu0 0.0
        %566 = vmatpush1.msra.mxu0 0.0
        %567 = vmatprep.subr.mxu0 0.0
        %568 = vmatpush1.msra.mxu0 0.0
        %569 = vmatprep.subr.mxu0 0.0
        %570 = vmatpush1.msra.mxu0 0.0
        %571 = vmatprep.subr.mxu0 0.0
        %572 = vmatpush1.msra.mxu0 0.0
        %573 = vmatprep.subr.mxu0 0.0
        %574 = vmatpush1.msra.mxu0 0.0
        %575 = vmatprep.subr.mxu0 0.0
        %576 = vmatpush1.msra.mxu0 0.0
        %577 = vmatprep.subr.mxu0 0.0
        %578 = vmatpush1.msra.mxu0 0.0
        %579 = vmatprep.subr.mxu0 0.0
        %580 = vmatpush1.msra.mxu0 0.0
        %581 = vmatprep.subr.mxu0 0.0
        %582 = vmatpush1.msra.mxu0 0.0
        %583 = vmatprep.subr.mxu0 0.0
        %584 = vmatpush1.msra.mxu0 0.0
        %585 = vmatprep.subr.mxu0 0.0
        %586 = vmatpush1.msra.mxu0 0.0
        %587 = vmatprep.subr.mxu0 0.0
        %588 = vmatpush1.msra.mxu0 0.0
        %589 = vmatprep.subr.mxu0 0.0
        %590 = vmatpush1.msra.mxu0 0.0
        %591 = vmatprep.subr.mxu0 0.0
        %592 = vmatpush1.msra.mxu0 0.0
        %593 = vmatprep.subr.mxu0 0.0
        %594 = vmatpush1.msra.mxu0 0.0
        %595 = vmatprep.subr.mxu0 0.0
        %596 = vmatpush1.msra.mxu0 0.0
        %597 = vmatprep.subr.mxu0 0.0
        %598 = vmatpush1.msra.mxu0 0.0
        %599 = vmatprep.subr.mxu0 0.0
        %600 = vmatpush1.msra.mxu0 0.0
        %601 = vmatprep.subr.mxu0 0.0
        %602 = vmatpush1.msra.mxu0 0.0
        %603 = vmatprep.subr.mxu0 0.0
        %604 = vmatpush1.msra.mxu0 0.0
        %605 = vmatprep.subr.mxu0 0.0
        %606 = vmatpush1.msra.mxu0 0.0
        %607 = vmatprep.subr.mxu0 0.0
        %608 = vmatpush1.msra.mxu0 0.0
        %609 = vmatprep.subr.mxu0 0.0
        %610 = vmatpush1.msra.mxu0 0.0
        %611 = vmatprep.subr.mxu0 0.0
        %612 = vmatpush1.msra.mxu0 0.0
        %613 = vmatprep.mubr.f32.mxu0 0.0
        %614 = vmatmul.mubr.f32.gmra.mrb[0].mxu0 %v547
        %v615 = vpop.f32.mrb[0].mxu0
        %v616 = vadd.f32 %v546, %v615
        %v617 = vpop.f32.mrb[0].mxu0
        %618 = vdwg.mxu0
        %v619 = vxor.u32 %v616, 2147483648
        %v620 = vmul.f32 %v619, 1.442695
        %v621 = vpow.pop %v620
        %v622 = vadd.f32 %v621, 1.0
        %v623 = vrcp.pop %v622
        %v624 = vmul.f32 1.0, %v623
        %v625 = vmul.f32 %v624, 2.0
        %v626 = vsub.f32 %v625, 1.0
        %v627 = vmul.f32 %v624, %v533
        %629 = vrot.lane.b32.xlu0 %v626, 64
        %v630 = vpop.permute.xlu0 %629
        %v632 = vmul.f32 %v624, %v630
        %634 = vrot.lane.b32.xlu0 %v632, 96
        %v635 = vpop.permute.xlu0 %634
        %v637 = vadd.f32 %v627, %v635
        %v638 = vtanh.pop %v637
        %640 = vrot.lane.b32.xlu0 %v638, 64
        %v641 = vpop.permute.xlu0 %640
        %v643 = vmul.f32 %v624, %v641
        %645 = vrot.lane.b32.xlu0 %v643, 64
        %v646 = vpop.permute.xlu0 %645
        %s648 = scalar_lea.vmem %s308, 8 [#allocation13]
        %649 = vst.msk [vmem:[%s648] sm:$0xff] %vm441, %v646
        %s650 = scalar_lea.vmem [#allocation2], 16
        %v651 = vld [vmem:[%s650] sm:$0xff]
        %v652 = vsel %vm441, %v646, 0
        %654 = vmatprep.subr.mxu0 0.0
        %655 = vmatpush1.msra.mxu0 %v434
        %656 = vmatprep.subr.mxu0 0.0
        %657 = vmatpush1.msra.mxu0 %v435
        %658 = vmatprep.subr.mxu0 0.0
        %659 = vmatpush1.msra.mxu0 %v436
        %660 = vmatprep.subr.mxu0 0.0
        %661 = vmatpush1.msra.mxu0 %v437
        %662 = vmatprep.subr.mxu0 0.0
        %663 = vmatpush1.msra.mxu0 0.0
        %664 = vmatprep.subr.mxu0 0.0
        %665 = vmatpush1.msra.mxu0 0.0
        %666 = vmatprep.subr.mxu0 0.0
        %667 = vmatpush1.msra.mxu0 0.0
        %668 = vmatprep.subr.mxu0 0.0
        %669 = vmatpush1.msra.mxu0 0.0
        %670 = vmatprep.subr.mxu0 0.0
        %671 = vmatpush1.msra.mxu0 0.0
        %672 = vmatprep.subr.mxu0 0.0
        %673 = vmatpush1.msra.mxu0 0.0
        %674 = vmatprep.subr.mxu0 0.0
        %675 = vmatpush1.msra.mxu0 0.0
        %676 = vmatprep.subr.mxu0 0.0
        %677 = vmatpush1.msra.mxu0 0.0
        %678 = vmatprep.subr.mxu0 0.0
        %679 = vmatpush1.msra.mxu0 0.0
        %680 = vmatprep.subr.mxu0 0.0
        %681 = vmatpush1.msra.mxu0 0.0
        %682 = vmatprep.subr.mxu0 0.0
        %683 = vmatpush1.msra.mxu0 0.0
        %684 = vmatprep.subr.mxu0 0.0
        %685 = vmatpush1.msra.mxu0 0.0
        %686 = vmatprep.subr.mxu0 0.0
        %687 = vmatpush1.msra.mxu0 0.0
        %688 = vmatprep.subr.mxu0 0.0
        %689 = vmatpush1.msra.mxu0 0.0
        %690 = vmatprep.subr.mxu0 0.0
        %691 = vmatpush1.msra.mxu0 0.0
        %692 = vmatprep.subr.mxu0 0.0
        %693 = vmatpush1.msra.mxu0 0.0
        %694 = vmatprep.subr.mxu0 0.0
        %695 = vmatpush1.msra.mxu0 0.0
        %696 = vmatprep.subr.mxu0 0.0
        %697 = vmatpush1.msra.mxu0 0.0
        %698 = vmatprep.subr.mxu0 0.0
        %699 = vmatpush1.msra.mxu0 0.0
        %700 = vmatprep.subr.mxu0 0.0
        %701 = vmatpush1.msra.mxu0 0.0
        %702 = vmatprep.subr.mxu0 0.0
        %703 = vmatpush1.msra.mxu0 0.0
        %704 = vmatprep.subr.mxu0 0.0
        %705 = vmatpush1.msra.mxu0 0.0
        %706 = vmatprep.subr.mxu0 0.0
        %707 = vmatpush1.msra.mxu0 0.0
        %708 = vmatprep.subr.mxu0 0.0
        %709 = vmatpush1.msra.mxu0 0.0
        %710 = vmatprep.subr.mxu0 0.0
        %711 = vmatpush1.msra.mxu0 0.0
        %712 = vmatprep.subr.mxu0 0.0
        %713 = vmatpush1.msra.mxu0 0.0
        %714 = vmatprep.subr.mxu0 0.0
        %715 = vmatpush1.msra.mxu0 0.0
        %716 = vmatprep.subr.mxu0 0.0
        %717 = vmatpush1.msra.mxu0 0.0
        %718 = vmatprep.mubr.f32.mxu0 0.0
        %719 = vmatmul.mubr.f32.gmra.mrb[0].mxu0 %v652
        %v720 = vpop.f32.mrb[0].mxu0
        %v721 = vadd.f32 %v651, %v720
        %v722 = vpop.f32.mrb[0].mxu0
        %723 = vdwg.mxu0
        %v724 = vxor.u32 %v721, 2147483648
        %v725 = vmul.f32 %v724, 1.442695
        %v726 = vpow.pop %v725
        %v727 = vadd.f32 %v726, 1.0
        %v728 = vrcp.pop %v727
        %v729 = vmul.f32 1.0, %v728
        %v730 = vmul.f32 %v729, 2.0
        %v731 = vsub.f32 %v730, 1.0
        %v732 = vmul.f32 %v729, %v637
        %734 = vrot.lane.b32.xlu0 %v731, 64
        %v735 = vpop.permute.xlu0 %734
        %v737 = vmul.f32 %v729, %v735
        %739 = vrot.lane.b32.xlu0 %v737, 96
        %v740 = vpop.permute.xlu0 %739
        %v742 = vadd.f32 %v732, %v740
        %v743 = vtanh.pop %v742
        %745 = vrot.lane.b32.xlu0 %v743, 64
        %v746 = vpop.permute.xlu0 %745
        %v748 = vmul.f32 %v729, %v746
        %750 = vrot.lane.b32.xlu0 %v748, 64
        %v751 = vpop.permute.xlu0 %750
        %s753 = scalar_lea.vmem %s308, 16 [#allocation13]
        %754 = vst.msk [vmem:[%s753] sm:$0xff] %vm441, %v751
        %s755 = scalar_lea.vmem [#allocation2], 24
        %v756 = vld [vmem:[%s755] sm:$0xff]
        %v757 = vsel %vm441, %v751, 0
        %759 = vmatprep.subr.mxu0 0.0
        %760 = vmatpush1.msra.mxu0 %v434
        %761 = vmatprep.subr.mxu0 0.0
        %762 = vmatpush1.msra.mxu0 %v435
        %763 = vmatprep.subr.mxu0 0.0
        %764 = vmatpush1.msra.mxu0 %v436
        %765 = vmatprep.subr.mxu0 0.0
        %766 = vmatpush1.msra.mxu0 %v437
        %767 = vmatprep.subr.mxu0 0.0
        %768 = vmatpush1.msra.mxu0 0.0
        %769 = vmatprep.subr.mxu0 0.0
        %770 = vmatpush1.msra.mxu0 0.0
        %771 = vmatprep.subr.mxu0 0.0
        %772 = vmatpush1.msra.mxu0 0.0
        %773 = vmatprep.subr.mxu0 0.0
        %774 = vmatpush1.msra.mxu0 0.0
        %775 = vmatprep.subr.mxu0 0.0
        %776 = vmatpush1.msra.mxu0 0.0
        %777 = vmatprep.subr.mxu0 0.0
        %778 = vmatpush1.msra.mxu0 0.0
        %779 = vmatprep.subr.mxu0 0.0
        %780 = vmatpush1.msra.mxu0 0.0
        %781 = vmatprep.subr.mxu0 0.0
        %782 = vmatpush1.msra.mxu0 0.0
        %783 = vmatprep.subr.mxu0 0.0
        %784 = vmatpush1.msra.mxu0 0.0
        %785 = vmatprep.subr.mxu0 0.0
        %786 = vmatpush1.msra.mxu0 0.0
        %787 = vmatprep.subr.mxu0 0.0
        %788 = vmatpush1.msra.mxu0 0.0
        %789 = vmatprep.subr.mxu0 0.0
        %790 = vmatpush1.msra.mxu0 0.0
        %791 = vmatprep.subr.mxu0 0.0
        %792 = vmatpush1.msra.mxu0 0.0
        %793 = vmatprep.subr.mxu0 0.0
        %794 = vmatpush1.msra.mxu0 0.0
        %795 = vmatprep.subr.mxu0 0.0
        %796 = vmatpush1.msra.mxu0 0.0
        %797 = vmatprep.subr.mxu0 0.0
        %798 = vmatpush1.msra.mxu0 0.0
        %799 = vmatprep.subr.mxu0 0.0
        %800 = vmatpush1.msra.mxu0 0.0
        %801 = vmatprep.subr.mxu0 0.0
        %802 = vmatpush1.msra.mxu0 0.0
        %803 = vmatprep.subr.mxu0 0.0
        %804 = vmatpush1.msra.mxu0 0.0
        %805 = vmatprep.subr.mxu0 0.0
        %806 = vmatpush1.msra.mxu0 0.0
        %807 = vmatprep.subr.mxu0 0.0
        %808 = vmatpush1.msra.mxu0 0.0
        %809 = vmatprep.subr.mxu0 0.0
        %810 = vmatpush1.msra.mxu0 0.0
        %811 = vmatprep.subr.mxu0 0.0
        %812 = vmatpush1.msra.mxu0 0.0
        %813 = vmatprep.subr.mxu0 0.0
        %814 = vmatpush1.msra.mxu0 0.0
        %815 = vmatprep.subr.mxu0 0.0
        %816 = vmatpush1.msra.mxu0 0.0
        %817 = vmatprep.subr.mxu0 0.0
        %818 = vmatpush1.msra.mxu0 0.0
        %819 = vmatprep.subr.mxu0 0.0
        %820 = vmatpush1.msra.mxu0 0.0
        %821 = vmatprep.subr.mxu0 0.0
        %822 = vmatpush1.msra.mxu0 0.0
        %823 = vmatprep.mubr.f32.mxu0 0.0
        %824 = vmatmul.mubr.f32.gmra.mrb[0].mxu0 %v757
        %v825 = vpop.f32.mrb[0].mxu0
        %v826 = vadd.f32 %v756, %v825
        %v827 = vpop.f32.mrb[0].mxu0
        %828 = vdwg.mxu0
        %v829 = vxor.u32 %v826, 2147483648
        %v830 = vmul.f32 %v829, 1.442695
        %v831 = vpow.pop %v830
        %v832 = vadd.f32 %v831, 1.0
        %v833 = vrcp.pop %v832
        %v834 = vmul.f32 1.0, %v833
        %v835 = vmul.f32 %v834, 2.0
        %v836 = vsub.f32 %v835, 1.0
        %v837 = vmul.f32 %v834, %v742
        %839 = vrot.lane.b32.xlu0 %v836, 64
        %v840 = vpop.permute.xlu0 %839
        %v842 = vmul.f32 %v834, %v840
        %844 = vrot.lane.b32.xlu0 %v842, 96
        %v845 = vpop.permute.xlu0 %844
        %v847 = vadd.f32 %v837, %v845
        %v848 = vtanh.pop %v847
        %850 = vrot.lane.b32.xlu0 %v848, 64
        %v851 = vpop.permute.xlu0 %850
        %v853 = vmul.f32 %v834, %v851
        %855 = vrot.lane.b32.xlu0 %v853, 64
        %v856 = vpop.permute.xlu0 %855
        %s858 = scalar_lea.vmem %s308, 24 [#allocation13]
        %859 = vst.msk [vmem:[%s858] sm:$0xff] %vm441, %v856
        %860 = vst.msk [vmem:[#allocation3] sm:$0xff] %vm441, %v856
        %861 = vst.msk [vmem:[#allocation4] sm:$0xff] %vm441, %v847
        %s862 = sand.u32 %s163, 1
        %s863 = scalar_lea.sflag [#allocation7], %s862
        %s864 = sand.u32 %s163, 1
        %s865 = smul.addr %s864, 32
        %s866 = scalar_lea.vmem [#allocation13], %s865
        // Predicated region
        $region61: #{tpu_custom_call.1} parent=39 // pred_check
          %p867 = pneg %p173
        $region62: #{tpu_custom_call.1} parent=39 // pred_check_branch
          %869 = sbr.rel (%p867) target = $region64
        $region63: #{tpu_custom_call.1} parent=39 // pred_region
          %s870 = smul.u32 4, %s29
          %s872 = ssub.s32 512, 512
          %873 = vsyncadd %s863, %s872
          %s874 = sadd.s32 %s28, %s870
          %s875 = smul.addr %s874, 128
          %s876 = scalar_lea.hbm %s5, %s875
          %s877 = sshll.u32 %s866, 4
          %s878 = int_to_ptr.vmem [resolvable:$true] %s877
          %883 = dma.vmem_to_hbm [thread:$0]  %s878, 512, %s876, %s863, 128, 128, 8
        $region64: #{tpu_custom_call.1} parent=39 // pred_fallthru
          _
      $region40: #{tpu_custom_call.1} parent=5 // pred_fallthru
        _
      %p884 = scmp.le.s32.totalorder 2, %s19
      // Predicated region
      $region65: #{tpu_custom_call.1} parent=5 // pred_check
        %p885 = pneg %p884
      $region66: #{tpu_custom_call.1} parent=5 // pred_check_branch
        %887 = sbr.rel (%p885) target = $region68
      $region67: #{tpu_custom_call.1} parent=5 // pred_region
        %s888 = ssub.s32 %s19, 2
        // Predicated region
        $region69: #{tpu_custom_call.1} parent=67 // pred_check
          %p889 = pneg %p179
        $region70: #{tpu_custom_call.1} parent=67 // pred_check_branch
          %891 = sbr.rel (%p889) target = $region72
        $region71: #{tpu_custom_call.1} parent=67 // pred_region
          %s892 = sand.u32 %s164, 1
          %s893 = scalar_lea.sflag [#allocation7], %s892
          %s894 = sand.u32 %s164, 1
          %s895 = smul.addr %s894, 32
          %s896 = scalar_lea.vmem [#allocation13], %s895
          %897 = dma.done %s893, 512
        $region72: #{tpu_custom_call.1} parent=67 // pred_fallthru
          _
      $region68: #{tpu_custom_call.1} parent=5 // pred_fallthru
        _
    $region6: #{tpu_custom_call.1} parent=1 // loop_footer
      %s23 = sadd.s32 1, %s19
    $region7: #{tpu_custom_call.1} parent=1 // loop_footer_branch
      %18 = sbr.rel target = $region3
    $region8: #{tpu_custom_call.1} parent=1 // loop_exit
      _
    %898 = vsyncpa [#allocation6], 1
    %s899 = scalar_lea.sflag [#allocation6], 1
    %900 = vsyncpa %s899, 1
    %901 = vsyncpa [#allocation9], 1
    %902 = vsyncpa [#allocation12], 1
    %903 = vsyncpa [#allocation7], 1
    %s904 = scalar_lea.sflag [#allocation7], 1
    %905 = vsyncpa %s904, 1

</llo_original>
